<compile_context>
chip_gen: v7x
topology: tpu7x:2x2x1
jax: 0.10.0
libtpu: 0.0.40
codegen_flags: <defaults>
</compile_context>

<pallas_src>
import functools
import math

import jax
import jax.numpy as jnp
from jax.experimental import pallas as pl
from jax.experimental.pallas import tpu as pltpu

IGNORE_IDX = -100
_LANE = 128


def _joint_head_kernel(q_ref, c_ref, expand_ref, w1q_ref, w1c_ref, b1_ref,
                       w2_ref, b2_ref, labels_ref, out_ref, *,
                       num_labels, loss_lane, tanh_bf16):
    # per-tile shapes:
    #   q_ref:      (TB, H)  bf16     c_ref:   (TM, H)  bf16, TM = TB*k
    #   expand_ref: (TM, TB) bf16 0/1 block-diagonal expansion (resident)
    #   w1q/w1c:    (H, F)   bf16     b1_ref:  (1, F)   f32
    #   w2_ref:     (F, LP)  bf16     b2_ref:  (1, LP)  f32   (LP = 128-padded)
    #   labels_ref: (TM, 1)  int32
    #   out_ref:    (TM, LP) f32 -- logits in lanes [0, num_labels), per-row CE
    #                               loss packed into spare lane `loss_lane`.

    # question half of the dense layer: one matmul per batch row, replicated to
    # the k candidates via a bf16 0/1 expansion matmul (single MXU pass, exact
    # 0/1 weights; only q_proj sees an extra bf16 rounding).
    q_proj = jnp.dot(q_ref[...], w1q_ref[...],
                     preferred_element_type=jnp.float32)              # (TB, F)
    q_rep = jnp.dot(expand_ref[...], q_proj.astype(jnp.bfloat16),
                    preferred_element_type=jnp.float32)               # (TM, F)

    # candidate half
    c_proj = jnp.dot(c_ref[...], w1c_ref[...],
                     preferred_element_type=jnp.float32)              # (TM, F)

    # dense -> tanh -> out_proj.  Dropout is identity in eval mode.
    pre = q_rep + c_proj + b1_ref[...]                                # (TM, F)
    if tanh_bf16:   # v6e/v7x: bf16 EUP tanh, result feeds the MXU directly
        h = jnp.tanh(pre.astype(jnp.bfloat16))
    else:           # v5e: no bf16 VPU/EUP -> keep tanh in f32, cast after
        h = jnp.tanh(pre).astype(jnp.bfloat16)
    logits = jnp.dot(h, w2_ref[...],
                     preferred_element_type=jnp.float32) + b2_ref[...]  # (TM,LP)

    # cross-entropy with ignore_index over the first num_labels lanes only.
    lane = jax.lax.broadcasted_iota(jnp.int32, logits.shape, 1)
    masked = jnp.where(lane < num_labels, logits, -1e30)
    m = jnp.max(masked, axis=-1, keepdims=True)
    lse = jnp.log(jnp.sum(jnp.exp(masked - m), axis=-1, keepdims=True)) + m
    labels = labels_ref[...]                                          # (TM, 1)
    picked = jnp.sum(jnp.where(lane == labels, logits, 0.0),
                     axis=-1, keepdims=True)
    rowloss = jnp.where(labels != IGNORE_IDX, lse - picked, 0.0)      # (TM, 1)

    # single lane-dense store: logits block with the per-row loss packed into a
    # spare padded lane (no second, lane-width-1 output stream / masked vst).
    out_ref[...] = jnp.where(lane == loss_lane, rowloss, logits)


def _choose_tile(B, k, target_rows):
    """Pick batch tile tb (and padded batch Bp) so tm = tb*k is MXU friendly:
    tb multiple of 16 (bf16 sublane packing) and tm multiple of 256/128/16."""
    tb_t = max(1, target_rows // max(k, 1))
    if tb_t >= B:
        return B, B                          # single tile, full-dim blocks
    for m_align in (256, 128, 16):
        step = m_align // math.gcd(k, m_align)   # smallest tb: k*tb % m_align == 0
        step = step * 16 // math.gcd(step, 16)   # and tb % 16 == 0
        if step > tb_t:
            continue
        tb = (tb_t // step) * step
        if tb < B:
            return tb, -(-B // tb) * tb
    return B, B


def joint_classification_head(hidden_state, labels, params, *, k, sentence_msl,
                              num_labels, tile_rows=None):
    """AE_k JointClassificationHead forward. Returns (loss, logits (B,k,L))."""
    B, S, H = hidden_state.shape
    assert S == (k + 1) * sentence_msl
    F = 2 * H
    # lane-dense (128-padded) logits width with >= 1 spare lane for the packed
    # per-row loss.
    LP = -(-(num_labels + 1) // _LANE) * _LANE
    loss_lane = LP - 1

    # Per-generation tuning: v7x has 64 MiB VMEM/TC (smaller tiles, tighter
    # limit); v5e/v6e have 128 MiB (bigger tiles amortize per-step overhead).
    # v5e has no bf16 VPU/EUP -> keep tanh in f32 there.
    kind = jax.devices()[0].device_kind.lower()
    if "v7" in kind:
        target_rows, vmem_limit, tanh_bf16 = 320, 48 * 1024 * 1024, True
    elif "v6" in kind:
        target_rows, vmem_limit, tanh_bf16 = 1024, 96 * 1024 * 1024, True
    elif "v5" in kind:
        target_rows, vmem_limit, tanh_bf16 = 1024, 96 * 1024 * 1024, False
    else:
        target_rows, vmem_limit, tanh_bf16 = 512, 48 * 1024 * 1024, False
    if tile_rows is not None:
        target_rows = tile_rows

    w1, b1, w2, b2 = params
    # feats = [q, c] concat  =>  feats @ w1 == q @ w1[:H] + c @ w1[H:]
    w1q = w1[:H, :].astype(jnp.bfloat16)
    w1c = w1[H:, :].astype(jnp.bfloat16)
    b1r = b1.reshape(1, F).astype(jnp.float32)
    w2p = jnp.zeros((F, LP), jnp.float32).at[:, :num_labels].set(w2)
    w2p = w2p.astype(jnp.bfloat16)
    b2p = jnp.zeros((1, LP), jnp.float32).at[:, :num_labels].set(
        b2.reshape(1, num_labels))

    # CLS extraction as cheap strided slices (no XLA gather round-trip):
    # question CLS at position 0, candidate CLS at positions msl*i, i=1..k.
    q = hidden_state[:, 0, :].astype(jnp.bfloat16)                     # (B, H)
    c = hidden_state[:, sentence_msl::sentence_msl, :][:, :k, :]
    c = c.reshape(B * k, H).astype(jnp.bfloat16)                       # (B*k, H)

    tb, Bp = _choose_tile(B, k, target_rows)
    n_tiles = Bp // tb
    tm = tb * k
    M, Mp = B * k, Bp * k

    labels_flat = labels.reshape(M).astype(jnp.int32)
    if Bp != B:
        q = jnp.pad(q, ((0, Bp - B), (0, 0)))
        c = jnp.pad(c, ((0, Mp - M), (0, 0)))
        labels_flat = jnp.pad(labels_flat, (0, Mp - M),
                              constant_values=IGNORE_IDX)
    labels2d = labels_flat.reshape(Mp, 1)

    # 0/1 block-diagonal expansion (tile row r takes question row r // k);
    # exact in bf16, built once in the wrapper, VMEM-resident in the kernel.
    expand = (jnp.arange(tm)[:, None] // k
              == jnp.arange(tb)[None, :]).astype(jnp.bfloat16)         # (tm, tb)

    kernel = functools.partial(_joint_head_kernel, num_labels=num_labels,
                               loss_lane=loss_lane, tanh_bf16=tanh_bf16)

    flops = (2 * Bp * H * F          # q projection
             + 2 * Mp * tb * F       # expansion matmul (bf16)
             + 2 * Mp * H * F        # c projection
             + 2 * Mp * F * LP)      # out_proj
    transcendentals = Mp * F + Mp * LP
    bytes_accessed = (2 * (Bp * H + Mp * H + Mp * tb + 2 * H * F + F * LP)
                      + 4 * (F + LP + Mp)
                      + 4 * Mp * LP)

    # NOTE: weight inputs use constant index maps; Mosaic keeps them resident
    # across the (parallel) batch-tile grid.
    out_p = pl.pallas_call(
        kernel,
        out_shape=jax.ShapeDtypeStruct((Mp, LP), jnp.float32),
        grid=(n_tiles,),
        in_specs=[
            pl.BlockSpec((tb, H), lambda i: (i, 0)),     # q
            pl.BlockSpec((tm, H), lambda i: (i, 0)),     # c
            pl.BlockSpec((tm, tb), lambda i: (0, 0)),    # expand (resident)
            pl.BlockSpec((H, F), lambda i: (0, 0)),      # w1_q (resident)
            pl.BlockSpec((H, F), lambda i: (0, 0)),      # w1_c (resident)
            pl.BlockSpec((1, F), lambda i: (0, 0)),      # b1
            pl.BlockSpec((F, LP), lambda i: (0, 0)),     # w2 (padded, resident)
            pl.BlockSpec((1, LP), lambda i: (0, 0)),     # b2 (padded)
            pl.BlockSpec((tm, 1), lambda i: (i, 0)),     # labels
        ],
        out_specs=pl.BlockSpec((tm, LP), lambda i: (i, 0)),   # logits + loss lane
        compiler_params=pltpu.CompilerParams(
            dimension_semantics=("parallel",),
            vmem_limit_bytes=vmem_limit,
        ),
        cost_estimate=pl.CostEstimate(
            flops=flops, transcendentals=transcendentals,
            bytes_accessed=bytes_accessed),
    )(q, c, expand, w1q, w1c, b1r, w2p, b2p, labels2d)

    logits = out_p[:M, :num_labels].reshape(B, k, num_labels)
    rowloss = out_p[:M, loss_lane]
    n_valid = jnp.sum((labels.reshape(-1) != IGNORE_IDX).astype(jnp.float32))
    loss = jnp.sum(rowloss) / jnp.maximum(n_valid, 1.0)
    return loss, logits


def _reference(hidden_state, labels, params, *, k, sentence_msl, num_labels):
    """Pure-JAX reference with matching (bf16 operand, f32 accum) precision."""
    B, S, H = hidden_state.shape
    cls_positions = [sentence_msl * i for i in range(k + 1)]
    q = hidden_state[:, cls_positions[0], :]
    c = hidden_state[:, jnp.array(cls_positions[1:]), :]
    q = jnp.broadcast_to(q[:, None, :], c.shape)
    feats = jnp.concatenate([q, c], axis=-1).reshape(-1, 2 * H)
    w1, b1, w2, b2 = params
    h = jnp.tanh(jnp.dot(feats.astype(jnp.bfloat16), w1.astype(jnp.bfloat16),
                         preferred_element_type=jnp.float32) + b1)
    logits = jnp.dot(h.astype(jnp.bfloat16), w2.astype(jnp.bfloat16),
                     preferred_element_type=jnp.float32) + b2
    lab = labels.reshape(-1)
    lse = jax.nn.logsumexp(logits, axis=-1)
    col = jnp.arange(num_labels)[None, :]
    picked = jnp.sum(jnp.where(col == lab[:, None], logits, 0.0), axis=-1)
    valid = lab != IGNORE_IDX
    per_row = jnp.where(valid, lse - picked, 0.0)
    loss = jnp.sum(per_row) / jnp.maximum(jnp.sum(valid), 1)
    return loss, logits.reshape(B, k, num_labels)


if __name__ == "__main__":
    # small config: B=2, k=3, sentence_msl=8, hidden=32, num_labels=2, AE_k
    B, K, MSL, H, L = 2, 3, 8, 32, 2
    S = (K + 1) * MSL
    F = 2 * H  # AE_k doubles the classifier hidden size

    key = jax.random.PRNGKey(0)
    k_hs, k_w1, k_b1, k_w2, k_b2 = jax.random.split(key, 5)

    hidden_state = jax.random.normal(k_hs, (B, S, H), dtype=jnp.float32)
    labels = jnp.array([[0, 1, IGNORE_IDX], [1, 0, 1]], dtype=jnp.int32)  # (B, K)

    params = (
        0.02 * jax.random.normal(k_w1, (F, F), dtype=jnp.float32),
        0.01 * jax.random.normal(k_b1, (F,), dtype=jnp.float32),
        0.02 * jax.random.normal(k_w2, (F, L), dtype=jnp.float32),
        0.01 * jax.random.normal(k_b2, (L,), dtype=jnp.float32),
    )

    loss, logits = joint_classification_head(
        hidden_state, labels, params, k=K, sentence_msl=MSL, num_labels=L)
    loss = jax.block_until_ready(loss)
    logits = jax.block_until_ready(logits)

    ref_loss, ref_logits = _reference(
        hidden_state, labels, params, k=K, sentence_msl=MSL, num_labels=L)

    assert logits.shape == (B, K, L)
    # bf16 matmul operands / bf16 tanh (intentional perf choices) -> bf16-level tol
    assert jnp.allclose(logits, ref_logits, atol=2e-3, rtol=2e-3), (
        float(jnp.max(jnp.abs(logits - ref_logits))))
    assert jnp.allclose(loss, ref_loss, atol=2e-3, rtol=2e-3), (
        float(loss), float(ref_loss))

    print("KERNEL_OK")
</pallas_src>

<mosaic_0001>
module attributes {stable_mosaic.version = 11 : i64} {
  func.func @_joint_head_kernel(%arg0: i32, %arg1: memref<2x32xbf16, #tpu.memory_space<vmem>>, %arg2: memref<6x32xbf16, #tpu.memory_space<vmem>>, %arg3: memref<6x2xbf16, #tpu.memory_space<vmem>>, %arg4: memref<32x64xbf16, #tpu.memory_space<vmem>>, %arg5: memref<32x64xbf16, #tpu.memory_space<vmem>>, %arg6: memref<1x64xf32, #tpu.memory_space<vmem>>, %arg7: memref<64x128xbf16, #tpu.memory_space<vmem>>, %arg8: memref<1x128xf32, #tpu.memory_space<vmem>>, %arg9: memref<6x1xi32, #tpu.memory_space<vmem>>, %arg10: memref<6x128xf32, #tpu.memory_space<vmem>>) attributes {dimension_semantics = [#tpu.dimension_semantics<parallel>], iteration_bounds = array<i64: 1>, scalar_prefetch = 0 : i64, scratch_operands = 0 : i64, tpu.core_type = #tpu.core_type<tc>, window_params = [{transform_indices = @transform_0, window_bounds = array<i64: 2, 32>}, {transform_indices = @transform_1, window_bounds = array<i64: 6, 32>}, {pipeline_mode = #tpu.pipeline_mode<synchronous>, transform_indices = @transform_2, window_bounds = array<i64: 6, 2>}, {pipeline_mode = #tpu.pipeline_mode<synchronous>, transform_indices = @transform_3, window_bounds = array<i64: 32, 64>}, {pipeline_mode = #tpu.pipeline_mode<synchronous>, transform_indices = @transform_4, window_bounds = array<i64: 32, 64>}, {pipeline_mode = #tpu.pipeline_mode<synchronous>, transform_indices = @transform_5, window_bounds = array<i64: 1, 64>}, {pipeline_mode = #tpu.pipeline_mode<synchronous>, transform_indices = @transform_6, window_bounds = array<i64: 64, 128>}, {pipeline_mode = #tpu.pipeline_mode<synchronous>, transform_indices = @transform_7, window_bounds = array<i64: 1, 128>}, {transform_indices = @transform_8, window_bounds = array<i64: 6, 1>}, {transform_indices = @transform_9, window_bounds = array<i64: 6, 128>}]} {
    %c0 = arith.constant 0 : index
    %c0_0 = arith.constant 0 : index
    %0 = vector.load %arg1[%c0, %c0_0] : memref<2x32xbf16, #tpu.memory_space<vmem>>, vector<2x32xbf16>
    %c0_1 = arith.constant 0 : index
    %c0_2 = arith.constant 0 : index
    %1 = vector.load %arg4[%c0_1, %c0_2] : memref<32x64xbf16, #tpu.memory_space<vmem>>, vector<32x64xbf16>
    %cst = arith.constant dense<0.000000e+00> : vector<2x64xf32>
    %2 = tpu.matmul %0, %1, %cst {dimension_numbers = #tpu.dot_dimension_numbers<[1], [0], [0], [1], [0, 0, 1, 1], [], []>} : vector<2x32xbf16>, vector<32x64xbf16>, vector<2x64xf32> -> vector<2x64xf32>
    %c0_3 = arith.constant 0 : index
    %c0_4 = arith.constant 0 : index
    %3 = vector.load %arg3[%c0_3, %c0_4] : memref<6x2xbf16, #tpu.memory_space<vmem>>, vector<6x2xbf16>
    %4 = arith.truncf %2 : vector<2x64xf32> to vector<2x64xbf16>
    %cst_5 = arith.constant dense<0.000000e+00> : vector<6x64xf32>
    %5 = tpu.matmul %3, %4, %cst_5 {dimension_numbers = #tpu.dot_dimension_numbers<[1], [0], [0], [1], [0, 0, 1, 1], [], []>} : vector<6x2xbf16>, vector<2x64xbf16>, vector<6x64xf32> -> vector<6x64xf32>
    %c0_6 = arith.constant 0 : index
    %c0_7 = arith.constant 0 : index
    %6 = vector.load %arg2[%c0_6, %c0_7] : memref<6x32xbf16, #tpu.memory_space<vmem>>, vector<6x32xbf16>
    %c0_8 = arith.constant 0 : index
    %c0_9 = arith.constant 0 : index
    %7 = vector.load %arg5[%c0_8, %c0_9] : memref<32x64xbf16, #tpu.memory_space<vmem>>, vector<32x64xbf16>
    %cst_10 = arith.constant dense<0.000000e+00> : vector<6x64xf32>
    %8 = tpu.matmul %6, %7, %cst_10 {dimension_numbers = #tpu.dot_dimension_numbers<[1], [0], [0], [1], [0, 0, 1, 1], [], []>} : vector<6x32xbf16>, vector<32x64xbf16>, vector<6x64xf32> -> vector<6x64xf32>
    %9 = arith.addf %5, %8 : vector<6x64xf32>
    %c0_11 = arith.constant 0 : index
    %c0_12 = arith.constant 0 : index
    %10 = vector.load %arg6[%c0_11, %c0_12] : memref<1x64xf32, #tpu.memory_space<vmem>>, vector<1x64xf32>
    %11 = vector.broadcast %10 : vector<1x64xf32> to vector<6x64xf32>
    %12 = arith.addf %9, %11 : vector<6x64xf32>
    %13 = math.tanh %12 : vector<6x64xf32>
    %14 = arith.truncf %13 : vector<6x64xf32> to vector<6x64xbf16>
    %c0_13 = arith.constant 0 : index
    %c0_14 = arith.constant 0 : index
    %15 = vector.load %arg7[%c0_13, %c0_14] : memref<64x128xbf16, #tpu.memory_space<vmem>>, vector<64x128xbf16>
    %cst_15 = arith.constant dense<0.000000e+00> : vector<6x128xf32>
    %16 = tpu.matmul %14, %15, %cst_15 {dimension_numbers = #tpu.dot_dimension_numbers<[1], [0], [0], [1], [0, 0, 1, 1], [], []>} : vector<6x64xbf16>, vector<64x128xbf16>, vector<6x128xf32> -> vector<6x128xf32>
    %c0_16 = arith.constant 0 : index
    %c0_17 = arith.constant 0 : index
    %17 = vector.load %arg8[%c0_16, %c0_17] : memref<1x128xf32, #tpu.memory_space<vmem>>, vector<1x128xf32>
    %18 = vector.broadcast %17 : vector<1x128xf32> to vector<6x128xf32>
    %19 = arith.addf %16, %18 : vector<6x128xf32>
    %20 = tpu.iota {dimensions = array<i32: 1>} : vector<6x128xi32>
    %c2_i32 = arith.constant 2 : i32
    %21 = vector.broadcast %c2_i32 : i32 to vector<6x128xi32>
    %22 = arith.cmpi slt, %20, %21 : vector<6x128xi32>
    %cst_18 = arith.constant -1.000000e+30 : f32
    %23 = vector.broadcast %cst_18 : f32 to vector<6x128xf32>
    %24 = arith.select %22, %19, %23 : vector<6x128xi1>, vector<6x128xf32>
    %cst_19 = arith.constant dense<0xFF800000> : vector<6xf32>
    %25 = vector.multi_reduction <maximumf>, %24, %cst_19 [1] : vector<6x128xf32> to vector<6xf32>
    %26 = vector.shape_cast %25 : vector<6xf32> to vector<6x1xf32>
    %27 = vector.broadcast %26 : vector<6x1xf32> to vector<6x128xf32>
    %28 = arith.subf %24, %27 : vector<6x128xf32>
    %29 = math.exp %28 : vector<6x128xf32>
    %cst_20 = arith.constant dense<0.000000e+00> : vector<6xf32>
    %30 = vector.multi_reduction <add>, %29, %cst_20 [1] : vector<6x128xf32> to vector<6xf32>
    %31 = vector.shape_cast %30 : vector<6xf32> to vector<6x1xf32>
    %32 = math.log %31 : vector<6x1xf32>
    %33 = arith.addf %32, %26 : vector<6x1xf32>
    %c0_21 = arith.constant 0 : index
    %c0_22 = arith.constant 0 : index
    %34 = vector.load %arg9[%c0_21, %c0_22] : memref<6x1xi32, #tpu.memory_space<vmem>>, vector<6x1xi32>
    %35 = vector.broadcast %34 : vector<6x1xi32> to vector<6x128xi32>
    %36 = arith.cmpi eq, %20, %35 : vector<6x128xi32>
    %cst_23 = arith.constant 0.000000e+00 : f32
    %37 = vector.broadcast %cst_23 : f32 to vector<6x128xf32>
    %38 = arith.select %36, %19, %37 : vector<6x128xi1>, vector<6x128xf32>
    %cst_24 = arith.constant dense<0.000000e+00> : vector<6xf32>
    %39 = vector.multi_reduction <add>, %38, %cst_24 [1] : vector<6x128xf32> to vector<6xf32>
    %40 = vector.shape_cast %39 : vector<6xf32> to vector<6x1xf32>
    %c-100_i32 = arith.constant -100 : i32
    %41 = vector.broadcast %c-100_i32 : i32 to vector<6x1xi32>
    %42 = arith.cmpi ne, %34, %41 : vector<6x1xi32>
    %43 = arith.subf %33, %40 : vector<6x1xf32>
    %cst_25 = arith.constant 0.000000e+00 : f32
    %44 = vector.broadcast %cst_25 : f32 to vector<6x1xf32>
    %45 = arith.select %42, %43, %44 : vector<6x1xi1>, vector<6x1xf32>
    %c127_i32 = arith.constant 127 : i32
    %46 = vector.broadcast %c127_i32 : i32 to vector<6x128xi32>
    %47 = arith.cmpi eq, %20, %46 : vector<6x128xi32>
    %48 = vector.shape_cast %45 : vector<6x1xf32> to vector<6x1xf32>
    %49 = vector.broadcast %48 : vector<6x1xf32> to vector<6x128xf32>
    %50 = arith.select %47, %49, %19 : vector<6x128xi1>, vector<6x128xf32>
    %c0_26 = arith.constant 0 : index
    %c0_27 = arith.constant 0 : index
    %51 = vector.load %arg10[%c0_26, %c0_27] : memref<6x128xf32, #tpu.memory_space<vmem>>, vector<6x128xf32>
    tpu.vector_store %arg10[%c0_26, %c0_27], %50 {strides = array<i32>} : memref<6x128xf32, #tpu.memory_space<vmem>>, vector<6x128xf32>,
    return
  }
  func.func @transform_0(%arg0: i32) -> (i32, i32) {
    %c0_i32 = arith.constant 0 : i32
    %c0_i32_0 = arith.constant 0 : i32
    return %arg0, %c0_i32 : i32, i32
  }
  func.func @transform_1(%arg0: i32) -> (i32, i32) {
    %c0_i32 = arith.constant 0 : i32
    %c0_i32_0 = arith.constant 0 : i32
    return %arg0, %c0_i32 : i32, i32
  }
  func.func @transform_2(%arg0: i32) -> (i32, i32) {
    %c0_i32 = arith.constant 0 : i32
    %c0_i32_0 = arith.constant 0 : i32
    %c0_i32_1 = arith.constant 0 : i32
    return %c0_i32, %c0_i32_0 : i32, i32
  }
  func.func @transform_3(%arg0: i32) -> (i32, i32) {
    %c0_i32 = arith.constant 0 : i32
    %c0_i32_0 = arith.constant 0 : i32
    %c0_i32_1 = arith.constant 0 : i32
    return %c0_i32, %c0_i32_0 : i32, i32
  }
  func.func @transform_4(%arg0: i32) -> (i32, i32) {
    %c0_i32 = arith.constant 0 : i32
    %c0_i32_0 = arith.constant 0 : i32
    %c0_i32_1 = arith.constant 0 : i32
    return %c0_i32, %c0_i32_0 : i32, i32
  }
  func.func @transform_5(%arg0: i32) -> (i32, i32) {
    %c0_i32 = arith.constant 0 : i32
    %c0_i32_0 = arith.constant 0 : i32
    %c0_i32_1 = arith.constant 0 : i32
    return %c0_i32, %c0_i32_0 : i32, i32
  }
  func.func @transform_6(%arg0: i32) -> (i32, i32) {
    %c0_i32 = arith.constant 0 : i32
    %c0_i32_0 = arith.constant 0 : i32
    %c0_i32_1 = arith.constant 0 : i32
    return %c0_i32, %c0_i32_0 : i32, i32
  }
  func.func @transform_7(%arg0: i32) -> (i32, i32) {
    %c0_i32 = arith.constant 0 : i32
    %c0_i32_0 = arith.constant 0 : i32
    %c0_i32_1 = arith.constant 0 : i32
    return %c0_i32, %c0_i32_0 : i32, i32
  }
  func.func @transform_8(%arg0: i32) -> (i32, i32) {
    %c0_i32 = arith.constant 0 : i32
    %c0_i32_0 = arith.constant 0 : i32
    return %arg0, %c0_i32 : i32, i32
  }
  func.func @transform_9(%arg0: i32) -> (i32, i32) {
    %c0_i32 = arith.constant 0 : i32
    %c0_i32_0 = arith.constant 0 : i32
    return %arg0, %c0_i32 : i32, i32
  }
}

</mosaic_0001>

<llo_original>
// kernel: tpu_custom_call.1
$region0: #{tpu_custom_call.1}
  #allocation0 [shape = 'u32[]', space=smem, size = 0x4, offset = 0x4, fixed_abs, tag = 'smem constant byte address 0x4 - core index']
  #allocation1 [shape = 'u32[144,128]{1,0:T(1,128)}', space=vmem, size = 0x12000, scoped, tag = 'internal scratch']
  %s0 = inlined_call_operand.hbm [shape: bf16[2,32], index: 0, kind: input, shape index: {}]
  %s1 = inlined_call_operand.vmem [shape: bf16[6,32], index: 1, kind: input, shape index: {}]
  %s2 = inlined_call_operand.vmem [shape: bf16[6,2], index: 2, kind: input, shape index: {}]
  %s3 = inlined_call_operand.hbm [shape: bf16[32,64], index: 3, kind: input, shape index: {}]
  %s4 = inlined_call_operand.hbm [shape: bf16[32,64], index: 4, kind: input, shape index: {}]
  %s5 = inlined_call_operand.hbm [shape: f32[1,64], index: 5, kind: input, shape index: {}]
  %s6 = inlined_call_operand.vmem [shape: bf16[64,128], index: 6, kind: input, shape index: {}]
  %s7 = inlined_call_operand.vmem [shape: f32[1,128], index: 7, kind: input, shape index: {}]
  %s8 = inlined_call_operand.vmem [shape: s32[6,1], index: 8, kind: input, shape index: {}]
  %s9 = inlined_call_operand.hbm [shape: f32[6,128], index: 9, kind: output, shape index: {}]
  %s10 = sld [smem:[#allocation0]]
  $region62: #{tpu_custom_call.1} parent=0
    _
  %s12 = ssub.s32 1, %s10
  %s13 = scalar_select 0, %s12, %s10
  $region1: #{tpu_custom_call.1} parent=0
    #allocation2 [shape = 'u8[512]{0}', space=vmem, size = 0x400, scoped, tag = 'input window, operand 0, single buffered']
    #allocation3 [shape = 's32[1]{0}', space=sflag, size = 0x4, scoped, tag = 'scoped memory for tpu_custom_call.1']
    #allocation4 [shape = 's32[1]{0}', space=sflag, size = 0x4, scoped, tag = 'scoped memory for tpu_custom_call.1']
    #allocation5 [shape = 'u8[8192]{0}', space=vmem, size = 0x2000, scoped, tag = 'input window, operand 3, single buffered']
    #allocation6 [shape = 's32[1]{0}', space=sflag, size = 0x4, scoped, tag = 'scoped memory for tpu_custom_call.1']
    #allocation7 [shape = 'u8[8192]{0}', space=vmem, size = 0x2000, scoped, tag = 'input window, operand 4, single buffered']
    #allocation8 [shape = 'u8[512]{0}', space=vmem, size = 0x400, scoped, tag = 'input window, operand 5, single buffered']
    #allocation9 [shape = 's32[1]{0}', space=sflag, size = 0x4, scoped, tag = 'scoped memory for tpu_custom_call.1']
    #allocation10 [shape = 'u8[4096]{0}', space=vmem, size = 0x1000, scoped, tag = 'output window, operand 0, single buffered']
    %14 = vsyncpa [#allocation3], 0
    %15 = vsyncpa [#allocation6], 0
    %16 = vsyncpa [#allocation9], 0
    %17 = vsyncpa [#allocation4], 0
    // Predicated region
    $region2: #{tpu_custom_call.1} parent=1 // pred_check
      _
    $region3: #{tpu_custom_call.1} parent=1 // pred_check_branch
      %19 = sbr.rel (0) target = $region5
    $region4: #{tpu_custom_call.1} parent=1 // pred_region
      %s21 = ssub.s32 16, 16
      %22 = vsyncadd [#allocation3], %s21
      %s24 = sshll.u32 [#allocation2], 4
      %s25 = int_to_ptr.vmem [resolvable:$true] %s24
      %27 = dma.hbm_to_vmem [thread:$0]  %s0, 16, %s25, [#allocation3]
    $region5: #{tpu_custom_call.1} parent=1 // pred_fallthru
      _
    // Predicated region
    $region6: #{tpu_custom_call.1} parent=1 // pred_check
      _
    $region7: #{tpu_custom_call.1} parent=1 // pred_check_branch
      %29 = sbr.rel (0) target = $region9
    $region8: #{tpu_custom_call.1} parent=1 // pred_region
      _
    $region9: #{tpu_custom_call.1} parent=1 // pred_fallthru
      _
    // Predicated region
    $region10: #{tpu_custom_call.1} parent=1 // pred_check
      _
    $region11: #{tpu_custom_call.1} parent=1 // pred_check_branch
      %31 = sbr.rel (0) target = $region13
    $region12: #{tpu_custom_call.1} parent=1 // pred_region
      _
    $region13: #{tpu_custom_call.1} parent=1 // pred_fallthru
      _
    // Predicated region
    $region14: #{tpu_custom_call.1} parent=1 // pred_check
      _
    $region15: #{tpu_custom_call.1} parent=1 // pred_check_branch
      %33 = sbr.rel (0) target = $region17
    $region16: #{tpu_custom_call.1} parent=1 // pred_region
      %s35 = ssub.s32 256, 256
      %36 = vsyncadd [#allocation6], %s35
      %s37 = sshll.u32 [#allocation5], 4
      %s38 = int_to_ptr.vmem [resolvable:$true] %s37
      %43 = dma.hbm_to_vmem [thread:$0]  %s3, 256, %s38, [#allocation6], 64, 64, 4
    $region17: #{tpu_custom_call.1} parent=1 // pred_fallthru
      _
    // Predicated region
    $region18: #{tpu_custom_call.1} parent=1 // pred_check
      _
    $region19: #{tpu_custom_call.1} parent=1 // pred_check_branch
      %45 = sbr.rel (0) target = $region21
    $region20: #{tpu_custom_call.1} parent=1 // pred_region
      %s47 = ssub.s32 256, 256
      %48 = vsyncadd [#allocation6], %s47
      %s49 = sshll.u32 [#allocation7], 4
      %s50 = int_to_ptr.vmem [resolvable:$true] %s49
      %55 = dma.hbm_to_vmem [thread:$0]  %s4, 256, %s50, [#allocation6], 64, 64, 4
    $region21: #{tpu_custom_call.1} parent=1 // pred_fallthru
      _
    // Predicated region
    $region22: #{tpu_custom_call.1} parent=1 // pred_check
      _
    $region23: #{tpu_custom_call.1} parent=1 // pred_check_branch
      %57 = sbr.rel (0) target = $region25
    $region24: #{tpu_custom_call.1} parent=1 // pred_region
      %s59 = ssub.s32 16, 16
      %60 = vsyncadd [#allocation9], %s59
      %s62 = sshll.u32 [#allocation8], 4
      %s63 = int_to_ptr.vmem [resolvable:$true] %s62
      %65 = dma.hbm_to_vmem [thread:$0]  %s5, 16, %s63, [#allocation9]
    $region25: #{tpu_custom_call.1} parent=1 // pred_fallthru
      _
    // Predicated region
    $region26: #{tpu_custom_call.1} parent=1 // pred_check
      _
    $region27: #{tpu_custom_call.1} parent=1 // pred_check_branch
      %67 = sbr.rel (0) target = $region29
    $region28: #{tpu_custom_call.1} parent=1 // pred_region
      _
    $region29: #{tpu_custom_call.1} parent=1 // pred_fallthru
      _
    // Predicated region
    $region30: #{tpu_custom_call.1} parent=1 // pred_check
      _
    $region31: #{tpu_custom_call.1} parent=1 // pred_check_branch
      %69 = sbr.rel (0) target = $region33
    $region32: #{tpu_custom_call.1} parent=1 // pred_region
      _
    $region33: #{tpu_custom_call.1} parent=1 // pred_fallthru
      _
    // Predicated region
    $region34: #{tpu_custom_call.1} parent=1 // pred_check
      _
    $region35: #{tpu_custom_call.1} parent=1 // pred_check_branch
      %71 = sbr.rel (0) target = $region37
    $region36: #{tpu_custom_call.1} parent=1 // pred_region
      _
    $region37: #{tpu_custom_call.1} parent=1 // pred_fallthru
      _
    // Predicated region
    $region38: #{tpu_custom_call.1} parent=1 // pred_check
      _
    $region39: #{tpu_custom_call.1} parent=1 // pred_check_branch
      %73 = sbr.rel (0) target = $region41
    $region40: #{tpu_custom_call.1} parent=1 // pred_region
      %74 = dma.done [#allocation3], 16
    $region41: #{tpu_custom_call.1} parent=1 // pred_fallthru
      _
    // Predicated region
    $region42: #{tpu_custom_call.1} parent=1 // pred_check
      _
    $region43: #{tpu_custom_call.1} parent=1 // pred_check_branch
      %76 = sbr.rel (0) target = $region45
    $region44: #{tpu_custom_call.1} parent=1 // pred_region
      %77 = dma.done [#allocation6], 256
    $region45: #{tpu_custom_call.1} parent=1 // pred_fallthru
      _
    // Predicated region
    $region46: #{tpu_custom_call.1} parent=1 // pred_check
      _
    $region47: #{tpu_custom_call.1} parent=1 // pred_check_branch
      %79 = sbr.rel (0) target = $region49
    $region48: #{tpu_custom_call.1} parent=1 // pred_region
      %80 = dma.done [#allocation6], 256
    $region49: #{tpu_custom_call.1} parent=1 // pred_fallthru
      _
    // Predicated region
    $region50: #{tpu_custom_call.1} parent=1 // pred_check
      _
    $region51: #{tpu_custom_call.1} parent=1 // pred_check_branch
      %82 = sbr.rel (0) target = $region53
    $region52: #{tpu_custom_call.1} parent=1 // pred_region
      %83 = dma.done [#allocation9], 16
    $region53: #{tpu_custom_call.1} parent=1 // pred_fallthru
      _
    %v85 = vld [vmem:[#allocation2] sm:$0x1]
    %v86 = vld [vmem:[#allocation5] sm:$0xf]
    %v87 = vld [vmem:[#allocation5 + $0x4] sm:$0xf]
    %v88 = vld [vmem:[#allocation5 + $0x8] sm:$0xf]
    %v89 = vld [vmem:[#allocation5 + $0xc] sm:$0xf]
    %v94 = vunpack.c.l.b16 %v86
    %v95 = vunpack.c.l.b16 %v87
    %v96 = vunpack.c.l.b16 %v88
    %v97 = vunpack.c.l.b16 %v89
    %v98 = vpack.c.b16 %v95, %v94
    %v99 = vpack.c.b16 %v97, %v96
    %vm102 = vcmask 261120
    %v104 = vsel %vm102, %v85, 0
    %106 = vmatprep.subr.bf16.mxu0 0
    %107 = vmatpush1.bf16.msra.mxu0 %v98
    %108 = vmatprep.subr.bf16.mxu0 0
    %109 = vmatpush1.bf16.msra.mxu0 %v99
    %110 = vmatprep.subr.bf16.mxu0 0
    %111 = vmatpush1.bf16.msra.mxu0 0
    %112 = vmatprep.subr.bf16.mxu0 0
    %113 = vmatpush1.bf16.msra.mxu0 0
    %114 = vmatprep.subr.bf16.mxu0 0
    %115 = vmatpush1.bf16.msra.mxu0 0
    %116 = vmatprep.subr.bf16.mxu0 0
    %117 = vmatpush1.bf16.msra.mxu0 0
    %118 = vmatprep.subr.bf16.mxu0 0
    %119 = vmatpush1.bf16.msra.mxu0 0
    %120 = vmatprep.subr.bf16.mxu0 0
    %121 = vmatpush1.bf16.msra.mxu0 0
    %122 = vmatprep.subr.bf16.mxu0 0
    %123 = vmatpush1.bf16.msra.mxu0 0
    %124 = vmatprep.subr.bf16.mxu0 0
    %125 = vmatpush1.bf16.msra.mxu0 0
    %126 = vmatprep.subr.bf16.mxu0 0
    %127 = vmatpush1.bf16.msra.mxu0 0
    %128 = vmatprep.subr.bf16.mxu0 0
    %129 = vmatpush1.bf16.msra.mxu0 0
    %130 = vmatprep.subr.bf16.mxu0 0
    %131 = vmatpush1.bf16.msra.mxu0 0
    %132 = vmatprep.subr.bf16.mxu0 0
    %133 = vmatpush1.bf16.msra.mxu0 0
    %134 = vmatprep.subr.bf16.mxu0 0
    %135 = vmatpush1.bf16.msra.mxu0 0
    %136 = vmatprep.subr.bf16.mxu0 0
    %137 = vmatpush1.bf16.msra.mxu0 0
    %138 = vmatprep.mubr.bf16.mxu0 0
    %139 = vmatmul.mubr.bf16.gmra.mrb[0].mxu0 %v104
    %v140 = vpop.f32.mrb[0].mxu0
    %v141 = vadd.f32 0.0, %v140
    %v142 = vpop.f32.mrb[0].mxu0
    %v143 = vpop.f32.mrb[0].mxu0
    %v144 = vpop.f32.mrb[0].mxu0
    %145 = vdwg.mxu0
    %v146 = vld [vmem:[%s2] sm:$0x7]
    %v147 = vpack.c.bf16 %v141, %v141
    %v148 = vld [vmem:[%s1] sm:$0x7]
    %v149 = vld [vmem:[#allocation7] sm:$0xf]
    %v150 = vld [vmem:[#allocation7 + $0x4] sm:$0xf]
    %v151 = vld [vmem:[#allocation7 + $0x8] sm:$0xf]
    %v152 = vld [vmem:[#allocation7 + $0xc] sm:$0xf]
    %v157 = vunpack.c.l.b16 %v149
    %v158 = vunpack.c.l.b16 %v150
    %v159 = vunpack.c.l.b16 %v151
    %v160 = vunpack.c.l.b16 %v152
    %v161 = vpack.c.b16 %v158, %v157
    %v162 = vpack.c.b16 %v160, %v159
    %v166 = vsel %vm102, %v148, 0
    %168 = vmatprep.subr.bf16.mxu0 0
    %169 = vmatpush1.bf16.msra.mxu0 %v161
    %170 = vmatprep.subr.bf16.mxu0 0
    %171 = vmatpush1.bf16.msra.mxu0 %v162
    %172 = vmatprep.subr.bf16.mxu0 0
    %173 = vmatpush1.bf16.msra.mxu0 0
    %174 = vmatprep.subr.bf16.mxu0 0
    %175 = vmatpush1.bf16.msra.mxu0 0
    %176 = vmatprep.subr.bf16.mxu0 0
    %177 = vmatpush1.bf16.msra.mxu0 0
    %178 = vmatprep.subr.bf16.mxu0 0
    %179 = vmatpush1.bf16.msra.mxu0 0
    %180 = vmatprep.subr.bf16.mxu0 0
    %181 = vmatpush1.bf16.msra.mxu0 0
    %182 = vmatprep.subr.bf16.mxu0 0
    %183 = vmatpush1.bf16.msra.mxu0 0
    %184 = vmatprep.subr.bf16.mxu0 0
    %185 = vmatpush1.bf16.msra.mxu0 0
    %186 = vmatprep.subr.bf16.mxu0 0
    %187 = vmatpush1.bf16.msra.mxu0 0
    %188 = vmatprep.subr.bf16.mxu0 0
    %189 = vmatpush1.bf16.msra.mxu0 0
    %190 = vmatprep.subr.bf16.mxu0 0
    %191 = vmatpush1.bf16.msra.mxu0 0
    %192 = vmatprep.subr.bf16.mxu0 0
    %193 = vmatpush1.bf16.msra.mxu0 0
    %194 = vmatprep.subr.bf16.mxu0 0
    %195 = vmatpush1.bf16.msra.mxu0 0
    %196 = vmatprep.subr.bf16.mxu0 0
    %197 = vmatpush1.bf16.msra.mxu0 0
    %198 = vmatprep.subr.bf16.mxu0 0
    %199 = vmatpush1.bf16.msra.mxu0 0
    %200 = vmatprep.mubr.bf16.mxu0 0
    %201 = vmatmul.mubr.bf16.gmra.mrb[0].mxu0 %v166
    %v202 = vpop.f32.mrb[0].mxu0
    %v203 = vadd.f32 0.0, %v202
    %v204 = vpop.f32.mrb[0].mxu0
    %v205 = vpop.f32.mrb[0].mxu0
    %v206 = vpop.f32.mrb[0].mxu0
    %207 = vdwg.mxu0
    %vm208 = vcmask 15360
    %v210 = vsel %vm208, %v146, 0
    %vm212 = vcmask 1040384
    %v214 = vsel %vm212, %v147, 0
    %216 = vmatprep.subr.bf16.mxu0 0
    %217 = vmatpush1.bf16.msra.mxu0 %v214
    %218 = vmatprep.subr.bf16.mxu0 0
    %219 = vmatpush1.bf16.msra.mxu0 0
    %220 = vmatprep.subr.bf16.mxu0 0
    %221 = vmatpush1.bf16.msra.mxu0 0
    %222 = vmatprep.subr.bf16.mxu0 0
    %223 = vmatpush1.bf16.msra.mxu0 0
    %224 = vmatprep.subr.bf16.mxu0 0
    %225 = vmatpush1.bf16.msra.mxu0 0
    %226 = vmatprep.subr.bf16.mxu0 0
    %227 = vmatpush1.bf16.msra.mxu0 0
    %228 = vmatprep.subr.bf16.mxu0 0
    %229 = vmatpush1.bf16.msra.mxu0 0
    %230 = vmatprep.subr.bf16.mxu0 0
    %231 = vmatpush1.bf16.msra.mxu0 0
    %232 = vmatprep.subr.bf16.mxu0 0
    %233 = vmatpush1.bf16.msra.mxu0 0
    %234 = vmatprep.subr.bf16.mxu0 0
    %235 = vmatpush1.bf16.msra.mxu0 0
    %236 = vmatprep.subr.bf16.mxu0 0
    %237 = vmatpush1.bf16.msra.mxu0 0
    %238 = vmatprep.subr.bf16.mxu0 0
    %239 = vmatpush1.bf16.msra.mxu0 0
    %240 = vmatprep.subr.bf16.mxu0 0
    %241 = vmatpush1.bf16.msra.mxu0 0
    %242 = vmatprep.subr.bf16.mxu0 0
    %243 = vmatpush1.bf16.msra.mxu0 0
    %244 = vmatprep.subr.bf16.mxu0 0
    %245 = vmatpush1.bf16.msra.mxu0 0
    %246 = vmatprep.subr.bf16.mxu0 0
    %247 = vmatpush1.bf16.msra.mxu0 0
    %248 = vmatprep.mubr.bf16.mxu0 0
    %249 = vmatmul.mubr.bf16.gmra.mrb[0].mxu0 %v210
    %v250 = vpop.f32.mrb[0].mxu0
    %v251 = vadd.f32 %v203, %v250
    %v252 = vpop.f32.mrb[0].mxu0
    %v253 = vpop.f32.mrb[0].mxu0
    %v254 = vpop.f32.mrb[0].mxu0
    %255 = vdwg.mxu0
    %v256 = vld [vmem:[#allocation8] sm:$0x1]
    %v258 = vlaneseq
    %v259 = vshrl.u32 %v258, 7
    %v260 = vsub.s32 0, %v259
    %v261 = vrot.slane %v256, %v260
    %v263 = vadd.f32 %v251, %v261
    %v264 = vtanh.pop %v263
    %v265 = vpack.c.bf16 %v264, %v264
    %v266 = vld [vmem:[%s6] sm:$0xf]
    %v267 = vld [vmem:[%s6 + $0x4] sm:$0xf]
    %v268 = vld [vmem:[%s6 + $0x8] sm:$0xf]
    %v269 = vld [vmem:[%s6 + $0xc] sm:$0xf]
    %v270 = vld [vmem:[%s6 + $0x10] sm:$0xf]
    %v271 = vld [vmem:[%s6 + $0x14] sm:$0xf]
    %v272 = vld [vmem:[%s6 + $0x18] sm:$0xf]
    %v273 = vld [vmem:[%s6 + $0x1c] sm:$0xf]
    %v274 = vld [vmem:[%s7] sm:$0x1]
    %v276 = vlaneseq
    %v277 = vshrl.u32 %v276, 7
    %v278 = vsub.s32 0, %v277
    %v279 = vrot.slane %v274, %v278
    %v289 = vunpack.c.l.b16 %v266
    %v290 = vunpack.c.l.b16 %v267
    %v291 = vunpack.c.l.b16 %v268
    %v292 = vunpack.c.l.b16 %v269
    %v293 = vunpack.c.l.b16 %v270
    %v294 = vunpack.c.l.b16 %v271
    %v295 = vunpack.c.l.b16 %v272
    %v296 = vunpack.c.l.b16 %v273
    %v297 = vpack.c.b16 %v290, %v289
    %v298 = vpack.c.b16 %v292, %v291
    %v299 = vpack.c.b16 %v294, %v293
    %v300 = vpack.c.b16 %v296, %v295
    %vm305 = vcmask 523264
    %v307 = vsel %vm305, %v265, 0
    %309 = vmatprep.subr.bf16.mxu0 0
    %310 = vmatpush1.bf16.msra.mxu0 %v297
    %311 = vmatprep.subr.bf16.mxu0 0
    %312 = vmatpush1.bf16.msra.mxu0 %v298
    %313 = vmatprep.subr.bf16.mxu0 0
    %314 = vmatpush1.bf16.msra.mxu0 %v299
    %315 = vmatprep.subr.bf16.mxu0 0
    %316 = vmatpush1.bf16.msra.mxu0 %v300
    %317 = vmatprep.subr.bf16.mxu0 0
    %318 = vmatpush1.bf16.msra.mxu0 0
    %319 = vmatprep.subr.bf16.mxu0 0
    %320 = vmatpush1.bf16.msra.mxu0 0
    %321 = vmatprep.subr.bf16.mxu0 0
    %322 = vmatpush1.bf16.msra.mxu0 0
    %323 = vmatprep.subr.bf16.mxu0 0
    %324 = vmatpush1.bf16.msra.mxu0 0
    %325 = vmatprep.subr.bf16.mxu0 0
    %326 = vmatpush1.bf16.msra.mxu0 0
    %327 = vmatprep.subr.bf16.mxu0 0
    %328 = vmatpush1.bf16.msra.mxu0 0
    %329 = vmatprep.subr.bf16.mxu0 0
    %330 = vmatpush1.bf16.msra.mxu0 0
    %331 = vmatprep.subr.bf16.mxu0 0
    %332 = vmatpush1.bf16.msra.mxu0 0
    %333 = vmatprep.subr.bf16.mxu0 0
    %334 = vmatpush1.bf16.msra.mxu0 0
    %335 = vmatprep.subr.bf16.mxu0 0
    %336 = vmatpush1.bf16.msra.mxu0 0
    %337 = vmatprep.subr.bf16.mxu0 0
    %338 = vmatpush1.bf16.msra.mxu0 0
    %339 = vmatprep.subr.bf16.mxu0 0
    %340 = vmatpush1.bf16.msra.mxu0 0
    %341 = vmatprep.mubr.bf16.mxu0 0
    %342 = vmatmul.mubr.bf16.gmra.mrb[0].mxu0 %v307
    %v343 = vpop.f32.mrb[0].mxu0
    %v344 = vadd.f32 %v279, %v343
    %v345 = vpop.f32.mrb[0].mxu0
    %v346 = vpop.f32.mrb[0].mxu0
    %v347 = vpop.f32.mrb[0].mxu0
    %348 = vdwg.mxu0
    %v349 = vlaneseq
    %v350 = vand.u32 %v349, 127
    %vm351 = vcmp.lt.s32.totalorder %v350, 2
    %v352 = vsel %vm351, %v344, -1e+30
    %vm353 = vcmask 1045504
    %v354 = vsel %vm353, %v352, -inf
    %355 = vmax.xlane.f32.xlu0 %v354
    %v356 = vpop.xlane.xlu0 %355
    %v357 = vsub.f32 %v352, %v356
    %v358 = vmul.f32 %v357, 1.442695
    %v359 = vpow.pop %v358
    %v360 = vsel %vm353, %v359, 0.0
    %361 = vadd.xlane.f32.xlu0 %v360
    %v362 = vpop.xlane.xlu0 %361
    %v363 = vlog2.pop %v362
    %v364 = vmul.f32 %v363, 0.6931472
    %v365 = vadd.f32 %v364, %v356
    %v366 = vld [vmem:[%s8] sm:$0x3f]
    %367 = vset.pattern.permute.xlu0 0
    %368 = vperm.xlu0 %367, %v366
    %v369 = vpop.permute.xlu0 %368
    %vm370 = vcmp.eq.s32.totalorder %v350, %v369
    %v371 = vsel %vm370, %v344, 0.0
    %v372 = vsel %vm353, %v371, 0.0
    %373 = vadd.xlane.f32.xlu0 %v372
    %v374 = vpop.xlane.xlu0 %373
    %vm375 = vcmp.ne.s32.totalorder %v366, 4294967196
    %v376 = vsub.f32 %v365, %v374
    %v377 = vsel %vm375, %v376, 0.0
    %vm378 = vcmp.eq.s32.totalorder %v350, 127
    %380 = vset.pattern.permute.xlu0 0
    %381 = vperm.xlu0 %380, %v377
    %v382 = vpop.permute.xlu0 %381
    %v384 = vsel %vm378, %v382, %v344
    %385 = vst [vmem:[#allocation10] sm:$0x3f] %v384
    // Predicated region
    $region54: #{tpu_custom_call.1} parent=1 // pred_check
      _
    $region55: #{tpu_custom_call.1} parent=1 // pred_check_branch
      %387 = sbr.rel (0) target = $region57
    $region56: #{tpu_custom_call.1} parent=1 // pred_region
      %s389 = ssub.s32 128, 128
      %390 = vsyncadd [#allocation4], %s389
      %s392 = sshll.u32 [#allocation10], 4
      %s393 = int_to_ptr.vmem [resolvable:$true] %s392
      %395 = dma.vmem_to_hbm [thread:$0]  %s393, 128, %s9, [#allocation4]
    $region57: #{tpu_custom_call.1} parent=1 // pred_fallthru
      _
    // Predicated region
    $region58: #{tpu_custom_call.1} parent=1 // pred_check
      _
    $region59: #{tpu_custom_call.1} parent=1 // pred_check_branch
      %397 = sbr.rel (0) target = $region61
    $region60: #{tpu_custom_call.1} parent=1 // pred_region
      %398 = dma.done [#allocation4], 128
    $region61: #{tpu_custom_call.1} parent=1 // pred_fallthru
      _
    %399 = vsyncpa [#allocation3], 1
    %400 = vsyncpa [#allocation6], 1
    %401 = vsyncpa [#allocation9], 1
    %402 = vsyncpa [#allocation4], 1

</llo_original>
